<compile_context>
chip_gen: v7x
topology: tpu7x:2x2x1
jax: 0.10.0
libtpu: 0.0.40
codegen_flags: <defaults>
</compile_context>

<pallas_src>
import jax
import jax.numpy as jnp
from jax import lax
from jax.experimental import pallas as pl
from jax.experimental.pallas import tpu as pltpu


# ----------------------- hardware-aware configuration ------------------------
def _tpu_info():
    try:
        return pltpu.get_tpu_info()
    except Exception:
        return None


def _vmem_budget_bytes():
    """~80% of physical VMEM (headroom for compiler scratch / semaphores).
    Fallback 48 MiB is safe on every generation, including v7x's 64 MiB."""
    info = _tpu_info()
    cap = getattr(info, "vmem_capacity_bytes", None) if info is not None else None
    if not cap:
        return 48 * 1024 * 1024
    return int(cap * 0.8)


def _num_tensorcores():
    """TensorCores reachable by one pallas_call (v5e/v6e: 1, v7x: 2).
    Conservative fallback of 1 -> batch is never split when it cannot help."""
    info = _tpu_info()
    if info is not None:
        for attr in ("num_tensorcores", "tensorcores_per_chip", "cores_per_chip"):
            v = getattr(info, attr, None)
            if isinstance(v, int) and v > 0:
                return v
    try:
        return max(1, int(getattr(jax.devices()[0], "num_cores", 1)))
    except Exception:
        return 1


_VMEM_LIMIT = _vmem_budget_bytes()
_NUM_TC = _num_tensorcores()


# --------------------------------- helpers -----------------------------------
def _sigmoid(x):
    # sigmoid(x) = 0.5 * (tanh(0.5 x) + 1): one EUP op instead of exp + recip.
    return 0.5 * jnp.tanh(0.5 * x) + 0.5


def _largest_divisor(n, cap):
    d = max(1, min(n, int(cap)))
    while n % d:
        d -= 1
    return d


def _row_tile(R, cap=512):
    """Row-block for the projection matmul; cap is a multiple of 8 so a
    partial (masked) last block is always layout-legal."""
    return R if R <= cap else cap


def _col_tile(G, cap=1024):
    """Gate-column (4H) tile for the projection: multiple of 128 dividing G."""
    if G <= cap or G % 128:
        return G
    nt = (cap // 128) * 128
    while nt >= 128 and G % nt:
        nt -= 128
    return nt if nt >= 128 else G


def _batch_tile(B):
    """Split batch across TensorCores only when there are >=2 of them (v7x);
    on 1-TC chips (v5e/v6e) splitting just halves MXU M-dim for nothing."""
    bt = B
    if _NUM_TC >= 2 and B >= 16 and B % 16 == 0:
        bt = B // 2
    # For very large B keep the recurrent matmul's M-dim MXU-sized.
    for cand in (256, 128):
        if bt > cand and bt % cand == 0:
            return cand
    return bt


def _resident_spec(block_shape, index_map):
    """Constant-index-map spec: single-buffered so VMEM-resident weights are
    not duplicated (critical at large H on v7x's 64 MiB VMEM)."""
    try:
        return pl.BlockSpec(block_shape, index_map,
                            pipeline_mode=pl.Buffered(1))
    except (TypeError, ValueError):     # older jax without pipeline_mode
        return pl.BlockSpec(block_shape, index_map)


def _time_chunk_size(T, bt, G, H, fc_cols, compute_dtype, requested):
    """Largest time chunk (dividing T) whose pipelined buffers + resident
    weights fit the generation-aware VMEM budget."""
    ed = jnp.dtype(compute_dtype).itemsize
    resident = H * G * ed + 4 * G + fc_cols * (H * ed + 4)   # W_hh, bias, FC
    per_step = 2 * bt * G * ed                               # xp double-buffered
    if fc_cols == 0:
        per_step += 2 * bt * H * ed                          # y double-buffered
    scratch = 2 * bt * H * 4                                 # h/c f32
    avail = _VMEM_LIMIT - resident - scratch - 4 * 1024 * 1024
    cap = max(1, min(int(requested), T, avail // max(per_step, 1)))
    return _largest_divisor(T, cap)


# -------------------------- input projection kernel --------------------------
def _input_proj_kernel(x_ref, w_ref, o_ref):
    o_ref[...] = jnp.dot(x_ref[...], w_ref[...],
                         preferred_element_type=jnp.float32).astype(o_ref.dtype)


def input_projection(x_2d, w_ih_t, compute_dtype):
    """(R, D) @ (D, 4H) -> (R, 4H) stored in compute_dtype.

    Grid-parallel over row tiles (cdiv / masked remainder) and gate-column
    tiles.  The bias is deliberately NOT added here; it is added in f32 inside
    the recurrence so the bf16 x_proj never compresses the biased gate value.
    """
    R, D = x_2d.shape
    G = w_ih_t.shape[1]
    rt = _row_tile(R)
    nt = _col_tile(G)
    return pl.pallas_call(
        _input_proj_kernel,
        out_shape=jax.ShapeDtypeStruct((R, G), compute_dtype),
        grid_spec=pltpu.PrefetchScalarGridSpec(
            num_scalar_prefetch=0,
            grid=(pl.cdiv(R, rt), G // nt),
            in_specs=[
                pl.BlockSpec((rt, D), lambda r, n: (r, 0)),
                pl.BlockSpec((D, nt), lambda r, n: (0, n)),
            ],
            out_specs=pl.BlockSpec((rt, nt), lambda r, n: (r, n)),
        ),
        compiler_params=pltpu.CompilerParams(
            dimension_semantics=("parallel", "parallel"),
            vmem_limit_bytes=_VMEM_LIMIT),
    )(x_2d.astype(compute_dtype), w_ih_t)


# ---------------------------- recurrence kernels ------------------------------
def _lstm_chunk(xp_ref, bias_ref, whh_ref, h_scr, c_scr, y_ref=None):
    """One time-chunk of the recurrence; h/c carried in VMEM scratch."""
    bt, H = h_scr.shape
    chunk = xp_ref.shape[0]
    w = whh_ref[...]                                          # (H, 4H) resident
    bias = jnp.broadcast_to(bias_ref[...], (bt, 4 * H))       # hoisted, f32

    def step(s, carry):
        h, c = carry
        gates = (xp_ref[s].astype(jnp.float32) + bias
                 + jnp.dot(h.astype(w.dtype), w,
                           preferred_element_type=jnp.float32))
        i_g = _sigmoid(gates[:, 0:H])
        f_g = _sigmoid(gates[:, H:2 * H])
        g_g = jnp.tanh(gates[:, 2 * H:3 * H])
        o_g = _sigmoid(gates[:, 3 * H:4 * H])
        c_new = f_g * c + i_g * g_g
        h_new = o_g * jnp.tanh(c_new)
        if y_ref is not None:
            y_ref[s] = h_new.astype(y_ref.dtype)
        return h_new, c_new

    # Unroll capped at 8: bounds (bt,4H) f32 gate temps / vreg pressure.
    h, c = lax.fori_loop(0, chunk, step, (h_scr[...], c_scr[...]),
                         unroll=min(chunk, 8))
    h_scr[...] = h
    c_scr[...] = c


def _lstm_seq_kernel(xp_ref, bias_ref, whh_ref, y_ref, h_scr, c_scr):
    @pl.when(pl.program_id(1) == 0)
    def _():
        h_scr[...] = jnp.zeros_like(h_scr)
        c_scr[...] = jnp.zeros_like(c_scr)

    _lstm_chunk(xp_ref, bias_ref, whh_ref, h_scr, c_scr, y_ref=y_ref)


def _lstm_final_kernel(xp_ref, bias_ref, whh_ref, wfc_ref, bfc_ref, o_ref,
                       h_scr, c_scr):
    c_idx = pl.program_id(1)

    @pl.when(c_idx == 0)
    def _():
        h_scr[...] = jnp.zeros_like(h_scr)
        c_scr[...] = jnp.zeros_like(c_scr)

    _lstm_chunk(xp_ref, bias_ref, whh_ref, h_scr, c_scr, y_ref=None)

    @pl.when(c_idx == pl.num_programs(1) - 1)
    def _():
        o_ref[...] = (jnp.dot(h_scr[...].astype(wfc_ref.dtype), wfc_ref[...],
                              preferred_element_type=jnp.float32)
                      + bfc_ref[...]).astype(o_ref.dtype)


def lstm_recurrence(x_proj, bias, w_hh_t, *, time_chunk, compute_dtype,
                    fc_w_t=None, fc_b=None):
    """Sequential LSTM recurrence over precomputed gate inputs.

    x_proj: (T, B, 4H) compute_dtype = x @ W_ih^T      (no bias)
    bias:   (1, 4H) f32 = b_ih + b_hh                  (added in f32 here)
    w_hh_t: (H, 4H) compute_dtype
    If fc_w_t/fc_b are given this is the last layer: the Linear head is fused
    and the kernel returns logits (B, C).  Otherwise returns hidden states
    (T, B, H) in compute_dtype for the next layer.
    """
    T, B, G = x_proj.shape
    H = G // 4
    bt = _batch_tile(B)
    fc_cols = 0 if fc_w_t is None else fc_w_t.shape[1]
    tc = _time_chunk_size(T, bt, G, H, fc_cols, compute_dtype, time_chunk)
    grid = (B // bt, T // tc)

    in_specs = [
        pl.BlockSpec((tc, bt, G), lambda b, c: (c, b, 0)),
        _resident_spec((1, G), lambda b, c: (0, 0)),      # bias, f32, resident
        _resident_spec((H, G), lambda b, c: (0, 0)),      # W_hh^T, resident
    ]
    scratch = [pltpu.VMEM((bt, H), jnp.float32),           # h state
               pltpu.VMEM((bt, H), jnp.float32)]           # c state
    cparams = pltpu.CompilerParams(
        dimension_semantics=("parallel", "arbitrary"),     # time is sequential
        vmem_limit_bytes=_VMEM_LIMIT)

    if fc_w_t is None:
        return pl.pallas_call(
            _lstm_seq_kernel,
            out_shape=jax.ShapeDtypeStruct((T, B, H), compute_dtype),
            grid_spec=pltpu.PrefetchScalarGridSpec(
                num_scalar_prefetch=0, grid=grid,
                in_specs=in_specs,
                out_specs=pl.BlockSpec((tc, bt, H), lambda b, c: (c, b, 0)),
                scratch_shapes=scratch),
            compiler_params=cparams,
        )(x_proj, bias, w_hh_t)

    C = fc_cols
    return pl.pallas_call(
        _lstm_final_kernel,
        out_shape=jax.ShapeDtypeStruct((B, C), jnp.float32),
        grid_spec=pltpu.PrefetchScalarGridSpec(
            num_scalar_prefetch=0, grid=grid,
            in_specs=in_specs + [
                _resident_spec((H, C), lambda b, c: (0, 0)),
                _resident_spec((1, C), lambda b, c: (0, 0)),
            ],
            out_specs=pl.BlockSpec((bt, C), lambda b, c: (b, 0)),
            scratch_shapes=scratch),
        compiler_params=cparams,
    )(x_proj, bias, w_hh_t, fc_w_t, fc_b)


# ------------------------------- model wrapper --------------------------------
def init_params(key, num_classes, input_size, hidden_size, num_layers):
    """Deterministic init matching PyTorch shapes (U(-1/sqrt(H), 1/sqrt(H)))."""
    params = {}
    std = 1.0 / float(hidden_size) ** 0.5
    keys = jax.random.split(key, num_layers * 4 + 2)
    ki = 0
    for l in range(num_layers):
        d_in = input_size if l == 0 else hidden_size
        params[f"w_ih_{l}"] = jax.random.uniform(
            keys[ki], (4 * hidden_size, d_in), jnp.float32, -std, std); ki += 1
        params[f"w_hh_{l}"] = jax.random.uniform(
            keys[ki], (4 * hidden_size, hidden_size), jnp.float32, -std, std); ki += 1
        params[f"b_ih_{l}"] = jax.random.uniform(
            keys[ki], (4 * hidden_size,), jnp.float32, -std, std); ki += 1
        params[f"b_hh_{l}"] = jax.random.uniform(
            keys[ki], (4 * hidden_size,), jnp.float32, -std, std); ki += 1
    params["w_fc"] = jax.random.uniform(
        keys[ki], (num_classes, hidden_size), jnp.float32, -std, std); ki += 1
    params["b_fc"] = jax.random.uniform(
        keys[ki], (num_classes,), jnp.float32, -std, std)
    return params


def prepare_params(params, num_layers, compute_dtype=jnp.bfloat16):
    """One-time transpose/cast of weights so the forward pass never
    materializes per-call HBM copies of them."""
    prep = {}
    for l in range(num_layers):
        prep[f"w_ih_t_{l}"] = jnp.transpose(params[f"w_ih_{l}"]).astype(compute_dtype)
        prep[f"w_hh_t_{l}"] = jnp.transpose(params[f"w_hh_{l}"]).astype(compute_dtype)
        bias = params[f"b_ih_{l}"] + params[f"b_hh_{l}"]
        prep[f"bias_{l}"] = bias.astype(jnp.float32).reshape(1, -1)
    prep["w_fc_t"] = jnp.transpose(params["w_fc"]).astype(compute_dtype)
    prep["b_fc"] = params["b_fc"].astype(jnp.float32).reshape(1, -1)
    return prep


def lstm_model_forward(x, prep, num_layers, *, compute_dtype=jnp.bfloat16,
                       time_chunk=32):
    """x: (B, T, input_size) -> logits (B, num_classes)."""
    seq = jnp.transpose(x, (1, 0, 2)).astype(compute_dtype)   # (T, B, D)
    out = None
    for l in range(num_layers):
        w_ih_t = prep[f"w_ih_t_{l}"]
        w_hh_t = prep[f"w_hh_t_{l}"]
        bias = prep[f"bias_{l}"]
        T, B, D = seq.shape
        G = w_ih_t.shape[1]
        # Hoisted, time-independent half of the gate math: one big matmul,
        # output stored in compute_dtype (halves HBM traffic vs f32).
        # TODO(synk): on v5e, consider fusing this projection into the
        # recurrence kernel (W_ih VMEM-resident) to skip the (T,B,4H) HBM
        # round-trip entirely.
        xp = input_projection(seq.reshape(T * B, D), w_ih_t,
                              compute_dtype).reshape(T, B, G)
        if l == num_layers - 1:
            out = lstm_recurrence(xp, bias, w_hh_t, time_chunk=time_chunk,
                                  compute_dtype=compute_dtype,
                                  fc_w_t=prep["w_fc_t"], fc_b=prep["b_fc"])
        else:
            seq = lstm_recurrence(xp, bias, w_hh_t, time_chunk=time_chunk,
                                  compute_dtype=compute_dtype)
    return out


# ---------------------------- pure-JAX reference ------------------------------
def lstm_model_ref(x, params, num_layers):
    B = x.shape[0]
    seq = x.astype(jnp.float32)
    for l in range(num_layers):
        w_ih, w_hh = params[f"w_ih_{l}"], params[f"w_hh_{l}"]
        b = params[f"b_ih_{l}"] + params[f"b_hh_{l}"]
        H = w_hh.shape[1]

        def step(carry, x_t, w_ih=w_ih, w_hh=w_hh, b=b):
            h, c = carry
            gates = x_t @ w_ih.T + h @ w_hh.T + b
            i, f, g, o = jnp.split(gates, 4, axis=-1)
            c = jax.nn.sigmoid(f) * c + jax.nn.sigmoid(i) * jnp.tanh(g)
            h = jax.nn.sigmoid(o) * jnp.tanh(c)
            return (h, c), h

        h0 = jnp.zeros((B, H), jnp.float32)
        c0 = jnp.zeros((B, H), jnp.float32)
        (_, _), ys = jax.lax.scan(step, (h0, c0), jnp.transpose(seq, (1, 0, 2)))
        seq = jnp.transpose(ys, (1, 0, 2))
    h_last = seq[:, -1, :]
    return h_last @ params["w_fc"].T + params["b_fc"]


# ------------------------------------ main -------------------------------------
if __name__ == "__main__":
    B, T = 2, 8
    input_size, hidden_size, num_layers, num_classes = 4, 32, 2, 5

    key = jax.random.PRNGKey(0)
    k_x, k_p = jax.random.split(key)
    x = jax.random.normal(k_x, (B, T, input_size), jnp.float32)
    params = init_params(k_p, num_classes, input_size, hidden_size, num_layers)

    ref = jax.block_until_ready(lstm_model_ref(x, params, num_layers))

    # f32 compute path: bit-level-close check against the pure-JAX reference.
    prep_f32 = prepare_params(params, num_layers, compute_dtype=jnp.float32)
    out_f32 = jax.block_until_ready(
        lstm_model_forward(x, prep_f32, num_layers,
                           compute_dtype=jnp.float32, time_chunk=8))
    assert out_f32.shape == (B, num_classes)
    assert jnp.allclose(out_f32, ref, atol=1e-4, rtol=1e-4), (out_f32, ref)

    # bf16 MXU operands + bf16 x_proj (f32 accumulation / f32 bias & state math).
    prep_bf16 = prepare_params(params, num_layers, compute_dtype=jnp.bfloat16)
    out_bf16 = jax.block_until_ready(
        lstm_model_forward(x, prep_bf16, num_layers,
                           compute_dtype=jnp.bfloat16, time_chunk=8))
    assert out_bf16.shape == (B, num_classes)
    assert jnp.allclose(out_bf16, ref, atol=5e-2, rtol=5e-2), (out_bf16, ref)

    print("KERNEL_OK")
</pallas_src>

<mosaic_0001>
module attributes {stable_mosaic.version = 11 : i64} {
  func.func @_input_proj_kernel(%arg0: i32, %arg1: i32, %arg2: memref<16x4xf32, #tpu.memory_space<vmem>>, %arg3: memref<4x128xf32, #tpu.memory_space<vmem>>, %arg4: memref<16x128xf32, #tpu.memory_space<vmem>>) attributes {dimension_semantics = [#tpu.dimension_semantics<parallel>, #tpu.dimension_semantics<parallel>], iteration_bounds = array<i64: 1, 1>, scalar_prefetch = 0 : i64, scratch_operands = 0 : i64, tpu.core_type = #tpu.core_type<tc>, window_params = [{transform_indices = @transform_0, window_bounds = array<i64: 16, 4>}, {transform_indices = @transform_1, window_bounds = array<i64: 4, 128>}, {transform_indices = @transform_2, window_bounds = array<i64: 16, 128>}]} {
    %c0 = arith.constant 0 : index
    %c0_0 = arith.constant 0 : index
    %0 = vector.load %arg2[%c0, %c0_0] : memref<16x4xf32, #tpu.memory_space<vmem>>, vector<16x4xf32>
    %c0_1 = arith.constant 0 : index
    %c0_2 = arith.constant 0 : index
    %1 = vector.load %arg3[%c0_1, %c0_2] : memref<4x128xf32, #tpu.memory_space<vmem>>, vector<4x128xf32>
    %cst = arith.constant dense<0.000000e+00> : vector<16x128xf32>
    %2 = tpu.matmul %0, %1, %cst {dimension_numbers = #tpu.dot_dimension_numbers<[1], [0], [0], [1], [0, 0, 1, 1], [], []>} : vector<16x4xf32>, vector<4x128xf32>, vector<16x128xf32> -> vector<16x128xf32>
    %c0_3 = arith.constant 0 : index
    %c0_4 = arith.constant 0 : index
    %3 = vector.load %arg4[%c0_3, %c0_4] : memref<16x128xf32, #tpu.memory_space<vmem>>, vector<16x128xf32>
    tpu.vector_store %arg4[%c0_3, %c0_4], %2 {strides = array<i32>} : memref<16x128xf32, #tpu.memory_space<vmem>>, vector<16x128xf32>,
    return
  }
  func.func @transform_0(%arg0: i32, %arg1: i32) -> (i32, i32) {
    %c0_i32 = arith.constant 0 : i32
    %c0_i32_0 = arith.constant 0 : i32
    return %arg0, %c0_i32 : i32, i32
  }
  func.func @transform_1(%arg0: i32, %arg1: i32) -> (i32, i32) {
    %c0_i32 = arith.constant 0 : i32
    %c0_i32_0 = arith.constant 0 : i32
    return %c0_i32, %arg1 : i32, i32
  }
  func.func @transform_2(%arg0: i32, %arg1: i32) -> (i32, i32) {
    %c0_i32 = arith.constant 0 : i32
    return %arg0, %arg1 : i32, i32
  }
}

</mosaic_0001>

<llo_original>
// kernel: tpu_custom_call.1
$region0: #{tpu_custom_call.1}
  #allocation0 [shape = 'u32[]', space=smem, size = 0x4, offset = 0x4, fixed_abs, tag = 'smem constant byte address 0x4 - core index']
  #allocation1 [shape = 'u32[144,128]{1,0:T(1,128)}', space=vmem, size = 0x12000, scoped, tag = 'internal scratch']
  %s0 = inlined_call_operand.vmem [shape: f32[16,4], index: 0, kind: input, shape index: {}]
  %s1 = inlined_call_operand.vmem [shape: f32[4,128], index: 1, kind: input, shape index: {}]
  %s2 = inlined_call_operand.hbm [shape: f32[16,128], index: 2, kind: output, shape index: {}]
  %s3 = sld [smem:[#allocation0]]
  $region18: #{tpu_custom_call.1} parent=0
    _
  %s5 = ssub.s32 1, %s3
  %s6 = scalar_select 0, %s5, %s3
  $region1: #{tpu_custom_call.1} parent=0
    #allocation2 [shape = 'u8[8192]{0}', space=vmem, size = 0x2000, scoped, tag = 'output window, operand 0, single buffered']
    #allocation3 [shape = 's32[1]{0}', space=sflag, size = 0x4, scoped, tag = 'scoped memory for tpu_custom_call.1']
    %7 = vsyncpa [#allocation3], 0
    // Predicated region
    $region2: #{tpu_custom_call.1} parent=1 // pred_check
      _
    $region3: #{tpu_custom_call.1} parent=1 // pred_check_branch
      %9 = sbr.rel (0) target = $region5
    $region4: #{tpu_custom_call.1} parent=1 // pred_region
      _
    $region5: #{tpu_custom_call.1} parent=1 // pred_fallthru
      _
    // Predicated region
    $region6: #{tpu_custom_call.1} parent=1 // pred_check
      _
    $region7: #{tpu_custom_call.1} parent=1 // pred_check_branch
      %11 = sbr.rel (0) target = $region9
    $region8: #{tpu_custom_call.1} parent=1 // pred_region
      _
    $region9: #{tpu_custom_call.1} parent=1 // pred_fallthru
      _
    %v12 = vld [vmem:[%s0] sm:$0xff]
    %v13 = vld [vmem:[%s0 + $0x8] sm:$0xff]
    %v14 = vld [vmem:[%s1] sm:$0xf]
    %vm15 = vcmask 31744
    %v17 = vsel %vm15, %v12, 0
    %v20 = vsel %vm15, %v13, 0
    %vm22 = vcmask 1043456
    %v24 = vsel %vm22, %v14, 0
    %26 = vmatprep.subr.mxu0 0.0
    %27 = vmatpush1.msra.mxu0 %v24
    %28 = vmatprep.subr.mxu0 0.0
    %29 = vmatpush1.msra.mxu0 0.0
    %30 = vmatprep.subr.mxu0 0.0
    %31 = vmatpush1.msra.mxu0 0.0
    %32 = vmatprep.subr.mxu0 0.0
    %33 = vmatpush1.msra.mxu0 0.0
    %34 = vmatprep.subr.mxu0 0.0
    %35 = vmatpush1.msra.mxu0 0.0
    %36 = vmatprep.subr.mxu0 0.0
    %37 = vmatpush1.msra.mxu0 0.0
    %38 = vmatprep.subr.mxu0 0.0
    %39 = vmatpush1.msra.mxu0 0.0
    %40 = vmatprep.subr.mxu0 0.0
    %41 = vmatpush1.msra.mxu0 0.0
    %42 = vmatprep.subr.mxu0 0.0
    %43 = vmatpush1.msra.mxu0 0.0
    %44 = vmatprep.subr.mxu0 0.0
    %45 = vmatpush1.msra.mxu0 0.0
    %46 = vmatprep.subr.mxu0 0.0
    %47 = vmatpush1.msra.mxu0 0.0
    %48 = vmatprep.subr.mxu0 0.0
    %49 = vmatpush1.msra.mxu0 0.0
    %50 = vmatprep.subr.mxu0 0.0
    %51 = vmatpush1.msra.mxu0 0.0
    %52 = vmatprep.subr.mxu0 0.0
    %53 = vmatpush1.msra.mxu0 0.0
    %54 = vmatprep.subr.mxu0 0.0
    %55 = vmatpush1.msra.mxu0 0.0
    %56 = vmatprep.subr.mxu0 0.0
    %57 = vmatpush1.msra.mxu0 0.0
    %58 = vmatprep.subr.mxu0 0.0
    %59 = vmatpush1.msra.mxu0 0.0
    %60 = vmatprep.subr.mxu0 0.0
    %61 = vmatpush1.msra.mxu0 0.0
    %62 = vmatprep.subr.mxu0 0.0
    %63 = vmatpush1.msra.mxu0 0.0
    %64 = vmatprep.subr.mxu0 0.0
    %65 = vmatpush1.msra.mxu0 0.0
    %66 = vmatprep.subr.mxu0 0.0
    %67 = vmatpush1.msra.mxu0 0.0
    %68 = vmatprep.subr.mxu0 0.0
    %69 = vmatpush1.msra.mxu0 0.0
    %70 = vmatprep.subr.mxu0 0.0
    %71 = vmatpush1.msra.mxu0 0.0
    %72 = vmatprep.subr.mxu0 0.0
    %73 = vmatpush1.msra.mxu0 0.0
    %74 = vmatprep.subr.mxu0 0.0
    %75 = vmatpush1.msra.mxu0 0.0
    %76 = vmatprep.subr.mxu0 0.0
    %77 = vmatpush1.msra.mxu0 0.0
    %78 = vmatprep.subr.mxu0 0.0
    %79 = vmatpush1.msra.mxu0 0.0
    %80 = vmatprep.subr.mxu0 0.0
    %81 = vmatpush1.msra.mxu0 0.0
    %82 = vmatprep.subr.mxu0 0.0
    %83 = vmatpush1.msra.mxu0 0.0
    %84 = vmatprep.subr.mxu0 0.0
    %85 = vmatpush1.msra.mxu0 0.0
    %86 = vmatprep.subr.mxu0 0.0
    %87 = vmatpush1.msra.mxu0 0.0
    %88 = vmatprep.subr.mxu0 0.0
    %89 = vmatpush1.msra.mxu0 0.0
    %90 = vmatprep.mubr.f32.mxu0 0.0
    %91 = vmatmul.mubr.f32.gmra.mrb[0].mxu0 %v17
    %v92 = vpop.f32.mrb[0].mxu0
    %v93 = vadd.f32 0.0, %v92
    %v94 = vpop.f32.mrb[0].mxu0
    %95 = vmatprep.mubr.f32.mxu0 0.0
    %96 = vmatmul.mubr.f32.gmra.mrb[0].mxu0 %v20
    %v97 = vpop.f32.mrb[0].mxu0
    %v98 = vadd.f32 0.0, %v97
    %v99 = vpop.f32.mrb[0].mxu0
    %100 = vdwg.mxu0
    %101 = vst [vmem:[#allocation2] sm:$0xff] %v93
    %102 = vst [vmem:[#allocation2 + $0x8] sm:$0xff] %v98
    // Predicated region
    $region10: #{tpu_custom_call.1} parent=1 // pred_check
      _
    $region11: #{tpu_custom_call.1} parent=1 // pred_check_branch
      %104 = sbr.rel (0) target = $region13
    $region12: #{tpu_custom_call.1} parent=1 // pred_region
      %s106 = ssub.s32 256, 256
      %107 = vsyncadd [#allocation3], %s106
      %s108 = sshll.u32 [#allocation2], 4
      %s109 = int_to_ptr.vmem [resolvable:$true] %s108
      %114 = dma.vmem_to_hbm [thread:$0]  %s109, 256, %s2, [#allocation3], 128, 128, 8
    $region13: #{tpu_custom_call.1} parent=1 // pred_fallthru
      _
    // Predicated region
    $region14: #{tpu_custom_call.1} parent=1 // pred_check
      _
    $region15: #{tpu_custom_call.1} parent=1 // pred_check_branch
      %116 = sbr.rel (0) target = $region17
    $region16: #{tpu_custom_call.1} parent=1 // pred_region
      %117 = dma.done [#allocation3], 256
    $region17: #{tpu_custom_call.1} parent=1 // pred_fallthru
      _
    %118 = vsyncpa [#allocation3], 1

</llo_original>
